<compile_context>
chip_gen: v7x
topology: tpu7x:2x2x1
jax: 0.10.0
libtpu: 0.0.40
codegen_flags: <defaults>
</compile_context>

<pallas_src>
import functools

import jax
import jax.numpy as jnp
from jax import lax
from jax.experimental import pallas as pl
from jax.experimental.pallas import tpu as pltpu

_ROW_PAD_KEY = 2**31 - 2  # sentinel keys for padded rows / columns (never match real labels)
_COL_PAD_KEY = 2**31 - 3
_VMEM_BUDGET = 24 * 1024 * 1024  # per-step working-set target; safe under v7x 32 MiB scoped default


def _round_up(x, m):
    return ((x + m - 1) // m) * m


def _choose_tiles(M, N, D, block_m, block_n, itemsize):
    """Pick (tm, tn): big tiles, >=2 row blocks when possible (v7x megacore), VMEM-bounded."""
    tn = min(block_n, _round_up(N, 128))
    tm = min(block_m, _round_up(M, 8))
    if M > 8:
        # Guarantee at least two row blocks so both v7x TensorCores get work.
        tm = min(tm, _round_up((M + 1) // 2, 8))

    def est(tm_, tn_):
        # double-buffered anchor + contrast input tiles, plus ~3 f32 [tm, tn] intermediates
        return 2 * (tm_ * D + D * tn_) * itemsize + 3 * tm_ * tn_ * 4

    while est(tm, tn) > _VMEM_BUDGET and tn >= 256 and tn % 256 == 0:
        tn //= 2
    while est(tm, tn) > _VMEM_BUDGET and tm >= 16 and tm % 16 == 0:
        tm //= 2
    return tm, tn


def _stance_keys_kernel(rk_ref, ck_ref, a_ref, ct_ref, out_ref, pos_acc, tot_acc,
                        *, add_const, pad_cols, tm, tn):
    """labels / eye path: positive mask recomputed from int32 keys (no [M, N] mask in HBM)."""
    i = pl.program_id(0)
    j = pl.program_id(1)
    nj = pl.num_programs(1)

    @pl.when(j == 0)
    def _():
        pos_acc[...] = jnp.zeros_like(pos_acc)
        tot_acc[...] = jnp.zeros_like(tot_acc)

    # Anchor tile already carries 1/temperature and is stored in matmul_dtype (wrapper fold).
    logits = jnp.dot(a_ref[...], ct_ref[...], preferred_element_type=jnp.float32)
    sim = jnp.exp(logits)

    rk = rk_ref[...]            # [tm, 1]  int32
    ck = ck_ref[...]            # [1, tn]  int32

    def accum(s):
        # Lane-dense accumulation: per-128-lane VALU adds; the single cross-lane (XLU)
        # reduce happens only once per row block, at finalize.
        pos_part = None
        tot_part = None
        for b in range(tn // 128):
            sl = slice(b * 128, (b + 1) * 128)
            s_b = s[:, sl]
            p_b = jnp.where(rk == ck[:, sl], s_b, 0.0)   # select, no bool->f32 convert
            tot_part = s_b if tot_part is None else tot_part + s_b
            pos_part = p_b if pos_part is None else pos_part + p_b
        pos_acc[...] += pos_part
        tot_acc[...] += tot_part

    row0 = i * tm
    col0 = j * tn
    # Does the global self-contrast diagonal (r == c) cross this tile?
    intersects = jnp.logical_and(row0 < col0 + tn, col0 < row0 + tm)

    @pl.when(intersects)
    def _():
        rr = lax.broadcasted_iota(jnp.int32, (tm, tn), 0) + row0
        cc = lax.broadcasted_iota(jnp.int32, (tm, tn), 1) + col0
        accum(jnp.where(rr == cc, 0.0, sim))   # drop self-contrast exactly

    @pl.when(jnp.logical_not(intersects))
    def _():
        accum(sim)

    @pl.when(j == nj - 1)
    def _():
        tot = jnp.sum(tot_acc[...], axis=1, keepdims=True)
        if pad_cols:
            # Zero-padded contrast columns contribute exactly exp(0) = 1 each to the total.
            tot = tot - jnp.float32(pad_cols)
        pos = jnp.sum(pos_acc[...], axis=1, keepdims=True)
        if add_const:
            # mask = eq + add_const  =>  pos = sum(sim*eq) + add_const * sum(sim)
            pos = pos + jnp.float32(add_const) * tot
        # log(pos / (pos + neg)) == log(pos) - log(total)
        out_ref[...] = jnp.log(pos) - jnp.log(tot)


def _stance_dense_kernel(cvalid_ref, a_ref, ct_ref, m_ref, out_ref, pos_acc, tot_acc,
                         *, tm, tn):
    """Explicit user-mask path (rare): mask block streamed per tile."""
    i = pl.program_id(0)
    j = pl.program_id(1)
    nj = pl.num_programs(1)

    @pl.when(j == 0)
    def _():
        pos_acc[...] = jnp.zeros_like(pos_acc)
        tot_acc[...] = jnp.zeros_like(tot_acc)

    logits = jnp.dot(a_ref[...], ct_ref[...], preferred_element_type=jnp.float32)
    sim = jnp.exp(logits) * cvalid_ref[...]   # zero padded columns (needed for modular mask reuse)

    def accum(s):
        pos_part = None
        tot_part = None
        for b in range(tn // 128):
            sl = slice(b * 128, (b + 1) * 128)
            s_b = s[:, sl]
            p_b = s_b * m_ref[:, sl]
            tot_part = s_b if tot_part is None else tot_part + s_b
            pos_part = p_b if pos_part is None else pos_part + p_b
        pos_acc[...] += pos_part
        tot_acc[...] += tot_part

    row0 = i * tm
    col0 = j * tn
    intersects = jnp.logical_and(row0 < col0 + tn, col0 < row0 + tm)

    @pl.when(intersects)
    def _():
        rr = lax.broadcasted_iota(jnp.int32, (tm, tn), 0) + row0
        cc = lax.broadcasted_iota(jnp.int32, (tm, tn), 1) + col0
        accum(jnp.where(rr == cc, 0.0, sim))

    @pl.when(jnp.logical_not(intersects))
    def _():
        accum(sim)

    @pl.when(j == nj - 1)
    def _():
        tot = jnp.sum(tot_acc[...], axis=1, keepdims=True)
        pos = jnp.sum(pos_acc[...], axis=1, keepdims=True)
        out_ref[...] = jnp.log(pos) - jnp.log(tot)


def stance_loss(features, labels=None, mask=None, *, temperature,
                contrast_mode="all", base_temperature=0.07,
                matmul_dtype=jnp.bfloat16, block_m=512, block_n=1024):
    """JAX/Pallas equivalent of Stance_loss.forward (base_temperature unused, as in torch)."""
    del base_temperature  # unused by the torch forward as well
    features = jnp.asarray(features, jnp.float32)
    if features.ndim < 3:
        raise ValueError("`features` needs to be [bsz, n_views, ...]")
    if features.ndim > 3:
        features = features.reshape(features.shape[0], features.shape[1], -1)
    bsz, n_views, _ = features.shape
    if labels is not None and mask is not None:
        raise ValueError("Cannot define both `labels` and `mask`")

    contrast_count = n_views
    # torch.cat(torch.unbind(features, dim=1), dim=0) -> [n_views*bsz, dim]
    contrast_feature = jnp.concatenate([features[:, v] for v in range(n_views)], axis=0)
    if contrast_mode == "one":
        anchor_feature = features[:, 0]
        anchor_count = 1
    elif contrast_mode == "all":
        anchor_feature = contrast_feature
        anchor_count = contrast_count
    else:
        raise ValueError(f"Unknown mode: {contrast_mode}")

    M, D = anchor_feature.shape
    N = contrast_feature.shape[0]
    inv_temp = float(1.0 / temperature)

    tm, tn = _choose_tiles(M, N, D, block_m, block_n, jnp.dtype(matmul_dtype).itemsize)
    M_pad = _round_up(M, tm)
    N_pad = _round_up(N, tn)
    pad_cols = N_pad - N

    # Wrapper-side layout plumbing (O(M*D + N*D)): 1/temperature folded into the anchor
    # (fuses into the pad/cast that exists anyway); contrast pre-transposed for the MXU.
    anchor_p = (jnp.pad(anchor_feature, ((0, M_pad - M), (0, 0))) * inv_temp).astype(matmul_dtype)
    contrast_t = jnp.pad(contrast_feature, ((0, N_pad - N), (0, 0))).T.astype(matmul_dtype)  # [D, N_pad]

    grid = (M_pad // tm, N_pad // tn)
    a_spec = pl.BlockSpec((tm, D), lambda i, j: (i, 0))
    ct_spec = pl.BlockSpec((D, tn), lambda i, j: (0, j))
    col_vec_spec = pl.BlockSpec((1, tn), lambda i, j: (0, j))
    row_vec_spec = pl.BlockSpec((tm, 1), lambda i, j: (i, 0))
    out_spec = pl.BlockSpec((tm, 1), lambda i, j: (i, 0))
    out_shape = jax.ShapeDtypeStruct((M_pad, 1), jnp.float32)
    scratch = [pltpu.VMEM((tm, 128), jnp.float32), pltpu.VMEM((tm, 128), jnp.float32)]
    cparams = pltpu.CompilerParams(dimension_semantics=("parallel", "arbitrary"))

    if mask is None:
        # labels path or identity (eye) path: mask factorizes as a key equality.
        if labels is None:
            keys = jnp.arange(bsz, dtype=jnp.int32)
            add_const = 0.0
        else:
            labels = jnp.asarray(labels).reshape(-1)
            if labels.shape[0] != bsz:
                raise ValueError("Num of labels does not match num of features")
            keys = labels.astype(jnp.int32)
            add_const = 1e-7  # torch: mask = eq(labels, labels.T) + 1e-7
        col_keys_base = jnp.tile(keys, (contrast_count,))                          # [N]
        row_keys_base = col_keys_base if contrast_mode == "all" else keys          # [M]
        row_keys = jnp.pad(row_keys_base, (0, M_pad - M),
                           constant_values=_ROW_PAD_KEY).reshape(M_pad, 1)
        col_keys = jnp.pad(col_keys_base, (0, N_pad - N),
                           constant_values=_COL_PAD_KEY).reshape(1, N_pad)

        kernel = functools.partial(_stance_keys_kernel, add_const=add_const,
                                   pad_cols=pad_cols, tm=tm, tn=tn)
        grid_spec = pltpu.PrefetchScalarGridSpec(
            num_scalar_prefetch=0, grid=grid,
            in_specs=[row_vec_spec, col_vec_spec, a_spec, ct_spec],
            out_specs=out_spec, scratch_shapes=scratch)
        log_ratio = pl.pallas_call(kernel, out_shape=out_shape, grid_spec=grid_spec,
                                   compiler_params=cparams)(
            row_keys, col_keys, anchor_p, contrast_t)
    else:
        # Explicit dense-mask path (rare): no key factorization for a user mask.
        mask = jnp.asarray(mask, jnp.float32)
        cvalid = (jnp.arange(N_pad, dtype=jnp.int32) < N).astype(jnp.float32).reshape(1, N_pad)
        if tm % bsz == 0 and tn % bsz == 0:
            # The tiled [M, N] mask repeats with period bsz along both axes, so every tile
            # sees the same [tm, tn] block: stream one block instead of an O(M*N) HBM array.
            mask_arg = jnp.tile(mask, (tm // bsz, tn // bsz))
            m_spec = pl.BlockSpec((tm, tn), lambda i, j: (0, 0))
        else:
            full_mask = jnp.tile(mask, (anchor_count, contrast_count))
            mask_arg = jnp.pad(full_mask, ((0, M_pad - M), (0, N_pad - N)))
            m_spec = pl.BlockSpec((tm, tn), lambda i, j: (i, j))
        kernel = functools.partial(_stance_dense_kernel, tm=tm, tn=tn)
        grid_spec = pltpu.PrefetchScalarGridSpec(
            num_scalar_prefetch=0, grid=grid,
            in_specs=[col_vec_spec, a_spec, ct_spec, m_spec],
            out_specs=out_spec, scratch_shapes=scratch)
        log_ratio = pl.pallas_call(kernel, out_shape=out_shape, grid_spec=grid_spec,
                                   compiler_params=cparams)(
            cvalid, anchor_p, contrast_t, mask_arg)

    # loss = -mean(log(pos / (pos + neg))) over the real (unpadded) anchor rows.
    return -jnp.mean(log_ratio[:M, 0])


def _stance_loss_ref(features, labels=None, mask=None, *, temperature, contrast_mode="all"):
    """Pure-JAX reference mirroring the torch forward exactly."""
    bsz, n_views = features.shape[0], features.shape[1]
    feats = features.reshape(bsz, n_views, -1)
    if labels is None and mask is None:
        mask = jnp.eye(bsz, dtype=jnp.float32)
    elif labels is not None:
        labels = jnp.asarray(labels).reshape(-1, 1)
        mask = (labels == labels.T).astype(jnp.float32) + 1e-7
    else:
        mask = jnp.asarray(mask, jnp.float32)
    contrast = jnp.concatenate([feats[:, v] for v in range(n_views)], axis=0)
    if contrast_mode == "one":
        anchor, anchor_count = feats[:, 0], 1
    else:
        anchor, anchor_count = contrast, n_views
    mask = jnp.tile(mask, (anchor_count, n_views))
    M = anchor.shape[0]
    lm = jnp.ones_like(mask).at[jnp.arange(M), jnp.arange(M)].set(0.0)
    sim = jnp.exp(anchor @ contrast.T / temperature)
    pos = jnp.sum(sim * (mask * lm), axis=1)
    neg = jnp.sum(sim * ((1.0 - mask) * lm), axis=1)
    return -jnp.mean(jnp.log(pos / (pos + neg)))


if __name__ == "__main__":
    key = jax.random.PRNGKey(0)
    k_feat, k_lab, k_mask, k_feat2, k_mask2 = jax.random.split(key, 5)
    bsz, n_views, dim = 8, 2, 128
    # Power-of-two 1/temperature + bf16-grid features keep bf16-MXU kernel vs. f32 reference tight.
    temperature = 0.0625

    features = jax.random.normal(k_feat, (bsz, n_views, dim), dtype=jnp.float32)
    features = features / jnp.linalg.norm(features, axis=-1, keepdims=True)
    features = features.astype(jnp.bfloat16).astype(jnp.float32)
    labels = jax.random.randint(k_lab, (bsz,), 0, 3)

    checks = []

    # 1) labels path, contrast_mode='all' (primary path).
    got = stance_loss(features, labels=labels, temperature=temperature)
    want = _stance_loss_ref(features, labels=labels, temperature=temperature)
    checks.append(("labels/all", got, want))

    # 2) no labels / no mask -> identity mask.
    got = stance_loss(features, temperature=temperature)
    want = _stance_loss_ref(features, temperature=temperature)
    checks.append(("eye/all", got, want))

    # 3) labels path, contrast_mode='one' (rectangular M != N).
    got = stance_loss(features, labels=labels, temperature=temperature, contrast_mode="one")
    want = _stance_loss_ref(features, labels=labels, temperature=temperature,
                            contrast_mode="one")
    checks.append(("labels/one", got, want))

    # 4) explicit dense-mask path (modular single-block mask: bsz divides tile sizes).
    bern = (jax.random.uniform(k_mask, (bsz, bsz)) < 0.3).astype(jnp.float32)
    dmask = jnp.maximum(bern, jnp.eye(bsz, dtype=jnp.float32))
    got = stance_loss(features, mask=dmask, temperature=temperature)
    want = _stance_loss_ref(features, mask=dmask, temperature=temperature)
    checks.append(("mask/all modular", got, want))

    # 5) explicit dense-mask fallback path (bsz does not divide the tile sizes).
    bsz2 = 6
    feats2 = jax.random.normal(k_feat2, (bsz2, n_views, dim), dtype=jnp.float32)
    feats2 = feats2 / jnp.linalg.norm(feats2, axis=-1, keepdims=True)
    feats2 = feats2.astype(jnp.bfloat16).astype(jnp.float32)
    bern2 = (jax.random.uniform(k_mask2, (bsz2, bsz2)) < 0.3).astype(jnp.float32)
    dmask2 = jnp.maximum(bern2, jnp.eye(bsz2, dtype=jnp.float32))
    got = stance_loss(feats2, mask=dmask2, temperature=temperature)
    want = _stance_loss_ref(feats2, mask=dmask2, temperature=temperature)
    checks.append(("mask/all streamed", got, want))

    for name, got, want in checks:
        got = jax.block_until_ready(got)
        assert jnp.allclose(got, want, rtol=2e-3, atol=2e-3), (name, float(got), float(want))

    print("KERNEL_OK")
</pallas_src>

<mosaic_0001>
module attributes {stable_mosaic.version = 11 : i64} {
  func.func @_stance_keys_kernel(%arg0: i32, %arg1: i32, %arg2: memref<8x1xi32, #tpu.memory_space<vmem>>, %arg3: memref<1x128xi32, #tpu.memory_space<vmem>>, %arg4: memref<8x128xbf16, #tpu.memory_space<vmem>>, %arg5: memref<128x128xbf16, #tpu.memory_space<vmem>>, %arg6: memref<8x1xf32, #tpu.memory_space<vmem>>, %arg7: memref<8x128xf32, #tpu.memory_space<vmem>>, %arg8: memref<8x128xf32, #tpu.memory_space<vmem>>) attributes {dimension_semantics = [#tpu.dimension_semantics<parallel>, #tpu.dimension_semantics<arbitrary>], iteration_bounds = array<i64: 2, 1>, scalar_prefetch = 0 : i64, scratch_operands = 2 : i64, tpu.core_type = #tpu.core_type<tc>, window_params = [{transform_indices = @transform_0, window_bounds = array<i64: 8, 1>}, {transform_indices = @transform_1, window_bounds = array<i64: 1, 128>}, {transform_indices = @transform_2, window_bounds = array<i64: 8, 128>}, {transform_indices = @transform_3, window_bounds = array<i64: 128, 128>}, {transform_indices = @transform_4, window_bounds = array<i64: 8, 1>}]} {
    %c0_i32 = arith.constant 0 : i32
    %0 = arith.cmpi eq, %arg1, %c0_i32 : i32
    %1 = arith.extui %0 : i1 to i32
    %c0_i32_0 = arith.constant 0 : i32
    %2 = arith.cmpi ne, %1, %c0_i32_0 : i32
    scf.if %2 {
      %cst_14 = arith.constant 0.000000e+00 : f32
      %24 = vector.broadcast %cst_14 : f32 to vector<8x128xf32>
      %c0_15 = arith.constant 0 : index
      %c0_16 = arith.constant 0 : index
      %25 = vector.load %arg7[%c0_15, %c0_16] : memref<8x128xf32, #tpu.memory_space<vmem>>, vector<8x128xf32>
      tpu.vector_store %arg7[%c0_15, %c0_16], %24 {strides = array<i32>} : memref<8x128xf32, #tpu.memory_space<vmem>>, vector<8x128xf32>,
      %cst_17 = arith.constant 0.000000e+00 : f32
      %26 = vector.broadcast %cst_17 : f32 to vector<8x128xf32>
      %c0_18 = arith.constant 0 : index
      %c0_19 = arith.constant 0 : index
      %27 = vector.load %arg8[%c0_18, %c0_19] : memref<8x128xf32, #tpu.memory_space<vmem>>, vector<8x128xf32>
      tpu.vector_store %arg8[%c0_18, %c0_19], %26 {strides = array<i32>} : memref<8x128xf32, #tpu.memory_space<vmem>>, vector<8x128xf32>,
    } else {
    }
    %c0 = arith.constant 0 : index
    %c0_1 = arith.constant 0 : index
    %3 = vector.load %arg4[%c0, %c0_1] : memref<8x128xbf16, #tpu.memory_space<vmem>>, vector<8x128xbf16>
    %c0_2 = arith.constant 0 : index
    %c0_3 = arith.constant 0 : index
    %4 = vector.load %arg5[%c0_2, %c0_3] : memref<128x128xbf16, #tpu.memory_space<vmem>>, vector<128x128xbf16>
    %cst = arith.constant dense<0.000000e+00> : vector<8x128xf32>
    %5 = tpu.matmul %3, %4, %cst {dimension_numbers = #tpu.dot_dimension_numbers<[1], [0], [0], [1], [0, 0, 1, 1], [], []>} : vector<8x128xbf16>, vector<128x128xbf16>, vector<8x128xf32> -> vector<8x128xf32>
    %6 = math.exp %5 : vector<8x128xf32>
    %c0_4 = arith.constant 0 : index
    %c0_5 = arith.constant 0 : index
    %7 = vector.load %arg2[%c0_4, %c0_5] : memref<8x1xi32, #tpu.memory_space<vmem>>, vector<8x1xi32>
    %c0_6 = arith.constant 0 : index
    %c0_7 = arith.constant 0 : index
    %8 = vector.load %arg3[%c0_6, %c0_7] : memref<1x128xi32, #tpu.memory_space<vmem>>, vector<1x128xi32>
    %c8_i32 = arith.constant 8 : i32
    %9 = arith.muli %arg0, %c8_i32 : i32
    %c128_i32 = arith.constant 128 : i32
    %10 = arith.muli %arg1, %c128_i32 : i32
    %c128_i32_8 = arith.constant 128 : i32
    %11 = arith.addi %10, %c128_i32_8 : i32
    %12 = arith.cmpi slt, %9, %11 : i32
    %c8_i32_9 = arith.constant 8 : i32
    %13 = arith.addi %9, %c8_i32_9 : i32
    %14 = arith.cmpi slt, %10, %13 : i32
    %15 = arith.andi %12, %14 : i1
    %16 = arith.extui %15 : i1 to i32
    %c0_i32_10 = arith.constant 0 : i32
    %17 = arith.cmpi ne, %16, %c0_i32_10 : i32
    scf.if %17 {
      %24 = tpu.iota {dimensions = array<i32: 0>} : vector<8x128xi32>
      %25 = vector.broadcast %9 : i32 to vector<8x128xi32>
      %26 = arith.addi %24, %25 : vector<8x128xi32>
      %27 = tpu.iota {dimensions = array<i32: 1>} : vector<8x128xi32>
      %28 = vector.broadcast %10 : i32 to vector<8x128xi32>
      %29 = arith.addi %27, %28 : vector<8x128xi32>
      %30 = arith.cmpi eq, %26, %29 : vector<8x128xi32>
      %cst_14 = arith.constant 0.000000e+00 : f32
      %31 = vector.broadcast %cst_14 : f32 to vector<8x128xf32>
      %32 = arith.select %30, %31, %6 : vector<8x128xi1>, vector<8x128xf32>
      %33 = vector.broadcast %7 : vector<8x1xi32> to vector<8x128xi32>
      %34 = vector.broadcast %8 : vector<1x128xi32> to vector<8x128xi32>
      %35 = arith.cmpi eq, %33, %34 : vector<8x128xi32>
      %cst_15 = arith.constant 0.000000e+00 : f32
      %36 = vector.broadcast %cst_15 : f32 to vector<8x128xf32>
      %37 = arith.select %35, %32, %36 : vector<8x128xi1>, vector<8x128xf32>
      %c0_16 = arith.constant 0 : index
      %c0_17 = arith.constant 0 : index
      %38 = vector.load %arg7[%c0_16, %c0_17] : memref<8x128xf32, #tpu.memory_space<vmem>>, vector<8x128xf32>
      %39 = arith.addf %38, %37 : vector<8x128xf32>
      %c0_18 = arith.constant 0 : index
      %c0_19 = arith.constant 0 : index
      %40 = vector.load %arg7[%c0_18, %c0_19] : memref<8x128xf32, #tpu.memory_space<vmem>>, vector<8x128xf32>
      tpu.vector_store %arg7[%c0_18, %c0_19], %39 {strides = array<i32>} : memref<8x128xf32, #tpu.memory_space<vmem>>, vector<8x128xf32>,
      %c0_20 = arith.constant 0 : index
      %c0_21 = arith.constant 0 : index
      %41 = vector.load %arg8[%c0_20, %c0_21] : memref<8x128xf32, #tpu.memory_space<vmem>>, vector<8x128xf32>
      %42 = arith.addf %41, %32 : vector<8x128xf32>
      %c0_22 = arith.constant 0 : index
      %c0_23 = arith.constant 0 : index
      %43 = vector.load %arg8[%c0_22, %c0_23] : memref<8x128xf32, #tpu.memory_space<vmem>>, vector<8x128xf32>
      tpu.vector_store %arg8[%c0_22, %c0_23], %42 {strides = array<i32>} : memref<8x128xf32, #tpu.memory_space<vmem>>, vector<8x128xf32>,
    } else {
    }
    %true = arith.constant true
    %18 = arith.xori %15, %true : i1
    %19 = arith.extui %18 : i1 to i32
    %c0_i32_11 = arith.constant 0 : i32
    %20 = arith.cmpi ne, %19, %c0_i32_11 : i32
    scf.if %20 {
      %24 = vector.broadcast %7 : vector<8x1xi32> to vector<8x128xi32>
      %25 = vector.broadcast %8 : vector<1x128xi32> to vector<8x128xi32>
      %26 = arith.cmpi eq, %24, %25 : vector<8x128xi32>
      %cst_14 = arith.constant 0.000000e+00 : f32
      %27 = vector.broadcast %cst_14 : f32 to vector<8x128xf32>
      %28 = arith.select %26, %6, %27 : vector<8x128xi1>, vector<8x128xf32>
      %c0_15 = arith.constant 0 : index
      %c0_16 = arith.constant 0 : index
      %29 = vector.load %arg7[%c0_15, %c0_16] : memref<8x128xf32, #tpu.memory_space<vmem>>, vector<8x128xf32>
      %30 = arith.addf %29, %28 : vector<8x128xf32>
      %c0_17 = arith.constant 0 : index
      %c0_18 = arith.constant 0 : index
      %31 = vector.load %arg7[%c0_17, %c0_18] : memref<8x128xf32, #tpu.memory_space<vmem>>, vector<8x128xf32>
      tpu.vector_store %arg7[%c0_17, %c0_18], %30 {strides = array<i32>} : memref<8x128xf32, #tpu.memory_space<vmem>>, vector<8x128xf32>,
      %c0_19 = arith.constant 0 : index
      %c0_20 = arith.constant 0 : index
      %32 = vector.load %arg8[%c0_19, %c0_20] : memref<8x128xf32, #tpu.memory_space<vmem>>, vector<8x128xf32>
      %33 = arith.addf %32, %6 : vector<8x128xf32>
      %c0_21 = arith.constant 0 : index
      %c0_22 = arith.constant 0 : index
      %34 = vector.load %arg8[%c0_21, %c0_22] : memref<8x128xf32, #tpu.memory_space<vmem>>, vector<8x128xf32>
      tpu.vector_store %arg8[%c0_21, %c0_22], %33 {strides = array<i32>} : memref<8x128xf32, #tpu.memory_space<vmem>>, vector<8x128xf32>,
    } else {
    }
    %c0_i32_12 = arith.constant 0 : i32
    %21 = arith.cmpi eq, %arg1, %c0_i32_12 : i32
    %22 = arith.extui %21 : i1 to i32
    %c0_i32_13 = arith.constant 0 : i32
    %23 = arith.cmpi ne, %22, %c0_i32_13 : i32
    scf.if %23 {
      %c0_14 = arith.constant 0 : index
      %c0_15 = arith.constant 0 : index
      %24 = vector.load %arg8[%c0_14, %c0_15] : memref<8x128xf32, #tpu.memory_space<vmem>>, vector<8x128xf32>
      %cst_16 = arith.constant dense<0.000000e+00> : vector<8xf32>
      %25 = vector.multi_reduction <add>, %24, %cst_16 [1] : vector<8x128xf32> to vector<8xf32>
      %26 = vector.shape_cast %25 : vector<8xf32> to vector<8x1xf32>
      %cst_17 = arith.constant 1.120000e+02 : f32
      %27 = vector.broadcast %cst_17 : f32 to vector<8x1xf32>
      %28 = arith.subf %26, %27 : vector<8x1xf32>
      %c0_18 = arith.constant 0 : index
      %c0_19 = arith.constant 0 : index
      %29 = vector.load %arg7[%c0_18, %c0_19] : memref<8x128xf32, #tpu.memory_space<vmem>>, vector<8x128xf32>
      %cst_20 = arith.constant dense<0.000000e+00> : vector<8xf32>
      %30 = vector.multi_reduction <add>, %29, %cst_20 [1] : vector<8x128xf32> to vector<8xf32>
      %31 = vector.shape_cast %30 : vector<8xf32> to vector<8x1xf32>
      %cst_21 = arith.constant 1.000000e-07 : f32
      %32 = vector.broadcast %cst_21 : f32 to vector<8x1xf32>
      %33 = arith.mulf %32, %28 : vector<8x1xf32>
      %34 = arith.addf %31, %33 : vector<8x1xf32>
      %35 = math.log %34 : vector<8x1xf32>
      %36 = math.log %28 : vector<8x1xf32>
      %37 = arith.subf %35, %36 : vector<8x1xf32>
      %c0_22 = arith.constant 0 : index
      %c0_23 = arith.constant 0 : index
      %38 = vector.load %arg6[%c0_22, %c0_23] : memref<8x1xf32, #tpu.memory_space<vmem>>, vector<8x1xf32>
      tpu.vector_store %arg6[%c0_22, %c0_23], %37 {strides = array<i32>} : memref<8x1xf32, #tpu.memory_space<vmem>>, vector<8x1xf32>,
    } else {
    }
    return
  }
  func.func @transform_0(%arg0: i32, %arg1: i32) -> (i32, i32) {
    %c0_i32 = arith.constant 0 : i32
    %c0_i32_0 = arith.constant 0 : i32
    return %arg0, %c0_i32 : i32, i32
  }
  func.func @transform_1(%arg0: i32, %arg1: i32) -> (i32, i32) {
    %c0_i32 = arith.constant 0 : i32
    %c0_i32_0 = arith.constant 0 : i32
    return %c0_i32, %arg1 : i32, i32
  }
  func.func @transform_2(%arg0: i32, %arg1: i32) -> (i32, i32) {
    %c0_i32 = arith.constant 0 : i32
    %c0_i32_0 = arith.constant 0 : i32
    return %arg0, %c0_i32 : i32, i32
  }
  func.func @transform_3(%arg0: i32, %arg1: i32) -> (i32, i32) {
    %c0_i32 = arith.constant 0 : i32
    %c0_i32_0 = arith.constant 0 : i32
    return %c0_i32, %arg1 : i32, i32
  }
  func.func @transform_4(%arg0: i32, %arg1: i32) -> (i32, i32) {
    %c0_i32 = arith.constant 0 : i32
    %c0_i32_0 = arith.constant 0 : i32
    return %arg0, %c0_i32 : i32, i32
  }
}

</mosaic_0001>

<llo_original>
// kernel: tpu_custom_call.1
$region0: #{tpu_custom_call.1}
  #allocation0 [shape = 'u32[]', space=smem, size = 0x4, offset = 0x4, fixed_abs, tag = 'smem constant byte address 0x4 - core index']
  #allocation1 [shape = 'u32[144,128]{1,0:T(1,128)}', space=vmem, size = 0x12000, scoped, tag = 'internal scratch']
  #allocation2 [shape = 'f32[8,128]{1,0:T(8,128)}', space=vmem, size = 0x1000, scoped, tag = 'scratch operand']
  #allocation3 [shape = 'f32[8,128]{1,0:T(8,128)}', space=vmem, size = 0x1000, scoped, tag = 'scratch operand']
  %s0 = inlined_call_operand.vmem [shape: s32[16,1], index: 0, kind: input, shape index: {}]
  %s1 = inlined_call_operand.vmem [shape: s32[1,128], index: 1, kind: input, shape index: {}]
  %s2 = inlined_call_operand.vmem [shape: bf16[16,128], index: 2, kind: input, shape index: {}]
  %s3 = inlined_call_operand.hbm [shape: bf16[128,128], index: 3, kind: input, shape index: {}]
  %s4 = inlined_call_operand.vmem [shape: f32[16,1], index: 4, kind: output, shape index: {}]
  %s5 = sld [smem:[#allocation0]]
  $region69: #{tpu_custom_call.1} parent=0
    _
  %s7 = ssub.s32 1, %s5
  %s8 = scalar_select 0, %s7, %s5
  $region1: #{tpu_custom_call.1} parent=0
    #allocation4 [shape = 'u8[32768]{0}', space=vmem, size = 0x8000, scoped, tag = 'input window, operand 3, single buffered']
    #allocation5 [shape = 's32[2]{0}', space=sflag, size = 0x8, scoped, tag = 'scoped memory for tpu_custom_call.1']
    %9 = vsyncpa [#allocation5], 0
    loop: start=0, step=1, limit=4
    $region2: #{tpu_custom_call.1} parent=1 // loop_pre_header
      _
    $region3: #{tpu_custom_call.1} parent=1 // loop_header
      %s11 = sphi 0, %s15
      %p12 = scmp.ge.s32.totalorder %s11, 4
      %s18 = sphi 0, %s30
      %s19 = sphi 0, %s26
      %s20 = sphi 0, %s18
      %s21 = sphi 0, %s19
      %s22 = sphi 0, %s20
      %s23 = sphi 0, %s21
      %s33 = sphi 0, %s35
      %s36 = sphi 0, %s33
      %s37 = sphi 0, %s36
      %s53 = sphi 0, %s37
      %s59 = sphi 0, %s61
      %s62 = sphi 0, %s59
      %s63 = sphi 0, %s62
      %s79 = sphi 0, %s63
      %s85 = sphi 0, %s87
      %s88 = sphi 0, %s85
      %s89 = sphi 0, %s88
      %s105 = sphi 0, %s89
      %s111 = sphi 0, %s113
      %s114 = sphi 0, %s111
      %s115 = sphi 0, %s114
      %s131 = sphi 0, %s115
      %s137 = sphi 0, %s139
      %s140 = sphi 0, %s137
      %s141 = sphi 0, %s140
      %s157 = sphi 0, %s141
    $region4: #{tpu_custom_call.1} parent=1 // loop_header_branch
      %14 = sbr.rel (%p12) target = $region8
    $region5: #{tpu_custom_call.1} parent=1 // loop_body
      %s16 = ssub.s32 %s11, 1
      %s17 = ssub.s32 %s11, 2
      %s24 = sadd.s32 1, %s19
      %p25 = scmp.ge.s32.totalorder %s24, 1
      %s26 = scalar_select %p25, 0, %s24
      %s27 = sadd.s32 1, %s18
      %s28 = scalar_select %p25, %s27, %s18
      %p29 = scmp.ge.s32.totalorder %s28, 2
      %s30 = scalar_select %p29, 0, %s28
      %s31 = ssub.s32 %s18, %s30
      %p32 = scmp.eq.s32.totalorder %s31, 0
      %s34 = sadd.s32 %s33, 1
      %s35 = scalar_select %p32, %s33, %s34
      %p38 = pneg %p32
      %p39 = scmp.eq.s32.totalorder %s11, 1
      %p40 = por %p38, %p39
      %p41 = scmp.ne.s32.totalorder %s33, %s36
      %p42 = scmp.eq.s32.totalorder %s11, 0
      %p43 = por %p41, %p42
      %p44 = scmp.ne.s32.totalorder %s33, %s36
      %p45 = scmp.eq.s32.totalorder %s16, 1
      %p46 = por %p44, %p45
      %p47 = scmp.ne.s32.totalorder %s36, %s37
      %p48 = scmp.eq.s32.totalorder %s16, 0
      %p49 = por %p47, %p48
      %p50 = scmp.ne.s32.totalorder %s36, %s37
      %p51 = scmp.eq.s32.totalorder %s17, 1
      %p52 = por %p50, %p51
      %p54 = scmp.ne.s32.totalorder %s37, %s53
      %p55 = scmp.eq.s32.totalorder %s17, 0
      %p56 = por %p54, %p55
      %s57 = ssub.s32 %s19, %s26
      %p58 = scmp.eq.s32.totalorder %s57, 0
      %s60 = sadd.s32 %s59, 1
      %s61 = scalar_select %p58, %s59, %s60
      %p64 = pneg %p58
      %p65 = scmp.eq.s32.totalorder %s11, 1
      %p66 = por %p64, %p65
      %p67 = scmp.ne.s32.totalorder %s59, %s62
      %p68 = scmp.eq.s32.totalorder %s11, 0
      %p69 = por %p67, %p68
      %p70 = scmp.ne.s32.totalorder %s59, %s62
      %p71 = scmp.eq.s32.totalorder %s16, 1
      %p72 = por %p70, %p71
      %p73 = scmp.ne.s32.totalorder %s62, %s63
      %p74 = scmp.eq.s32.totalorder %s16, 0
      %p75 = por %p73, %p74
      %p76 = scmp.ne.s32.totalorder %s62, %s63
      %p77 = scmp.eq.s32.totalorder %s17, 1
      %p78 = por %p76, %p77
      %p80 = scmp.ne.s32.totalorder %s63, %s79
      %p81 = scmp.eq.s32.totalorder %s17, 0
      %p82 = por %p80, %p81
      %s83 = ssub.s32 %s18, %s30
      %p84 = scmp.eq.s32.totalorder %s83, 0
      %s86 = sadd.s32 %s85, 1
      %s87 = scalar_select %p84, %s85, %s86
      %p90 = pneg %p84
      %p91 = scmp.eq.s32.totalorder %s11, 1
      %p92 = por %p90, %p91
      %p93 = scmp.ne.s32.totalorder %s85, %s88
      %p94 = scmp.eq.s32.totalorder %s11, 0
      %p95 = por %p93, %p94
      %p96 = scmp.ne.s32.totalorder %s85, %s88
      %p97 = scmp.eq.s32.totalorder %s16, 1
      %p98 = por %p96, %p97
      %p99 = scmp.ne.s32.totalorder %s88, %s89
      %p100 = scmp.eq.s32.totalorder %s16, 0
      %p101 = por %p99, %p100
      %p102 = scmp.ne.s32.totalorder %s88, %s89
      %p103 = scmp.eq.s32.totalorder %s17, 1
      %p104 = por %p102, %p103
      %p106 = scmp.ne.s32.totalorder %s89, %s105
      %p107 = scmp.eq.s32.totalorder %s17, 0
      %p108 = por %p106, %p107
      %s109 = ssub.s32 %s19, %s26
      %p110 = scmp.eq.s32.totalorder %s109, 0
      %s112 = sadd.s32 %s111, 1
      %s113 = scalar_select %p110, %s111, %s112
      %p116 = pneg %p110
      %p117 = scmp.eq.s32.totalorder %s11, 1
      %p118 = por %p116, %p117
      %p119 = scmp.ne.s32.totalorder %s111, %s114
      %p120 = scmp.eq.s32.totalorder %s11, 0
      %p121 = por %p119, %p120
      %p122 = scmp.ne.s32.totalorder %s111, %s114
      %p123 = scmp.eq.s32.totalorder %s16, 1
      %p124 = por %p122, %p123
      %p125 = scmp.ne.s32.totalorder %s114, %s115
      %p126 = scmp.eq.s32.totalorder %s16, 0
      %p127 = por %p125, %p126
      %p128 = scmp.ne.s32.totalorder %s114, %s115
      %p129 = scmp.eq.s32.totalorder %s17, 1
      %p130 = por %p128, %p129
      %p132 = scmp.ne.s32.totalorder %s115, %s131
      %p133 = scmp.eq.s32.totalorder %s17, 0
      %p134 = por %p132, %p133
      %s135 = ssub.s32 %s18, %s30
      %p136 = scmp.eq.s32.totalorder %s135, 0
      %s138 = sadd.s32 %s137, 1
      %s139 = scalar_select %p136, %s137, %s138
      %p142 = pneg %p136
      %p143 = scmp.eq.s32.totalorder %s11, 1
      %p144 = por %p142, %p143
      %p145 = scmp.ne.s32.totalorder %s137, %s140
      %p146 = scmp.eq.s32.totalorder %s11, 0
      %p147 = por %p145, %p146
      %p148 = scmp.ne.s32.totalorder %s137, %s140
      %p149 = scmp.eq.s32.totalorder %s16, 1
      %p150 = por %p148, %p149
      %p151 = scmp.ne.s32.totalorder %s140, %s141
      %p152 = scmp.eq.s32.totalorder %s16, 0
      %p153 = por %p151, %p152
      %p154 = scmp.ne.s32.totalorder %s140, %s141
      %p155 = scmp.eq.s32.totalorder %s17, 1
      %p156 = por %p154, %p155
      %p158 = scmp.ne.s32.totalorder %s141, %s157
      %p159 = scmp.eq.s32.totalorder %s17, 0
      %p160 = por %p158, %p159
      %p161 = scmp.le.s32.totalorder 1, %s11
      %p162 = scmp.lt.s32.totalorder %s11, 3
      %p163 = pnand %p161, %p162
      %p164 = pneg %p163
      // Predicated region
      $region9: #{tpu_custom_call.1} parent=5 // pred_check
        _
      $region10: #{tpu_custom_call.1} parent=5 // pred_check_branch
        %166 = sbr.rel (%p163) target = $region12
      $region11: #{tpu_custom_call.1} parent=5 // pred_region
        %s167 = ssub.s32 %s11, 1
        // Predicated region
        $region13: #{tpu_custom_call.1} parent=11 // pred_check
          %p168 = pneg %p75
        $region14: #{tpu_custom_call.1} parent=11 // pred_check_branch
          %170 = sbr.rel (%p168) target = $region16
        $region15: #{tpu_custom_call.1} parent=11 // pred_region
          %p171 = scmp.lt.s32.totalorder %s21, 0
          %s172 = scalar_select %p171, %s21, 0
          %s173 = scalar_lea.vmem %s1, %s172
        $region16: #{tpu_custom_call.1} parent=11 // pred_fallthru
          _
        // Predicated region
        $region17: #{tpu_custom_call.1} parent=11 // pred_check
          %p174 = pneg %p127
        $region18: #{tpu_custom_call.1} parent=11 // pred_check_branch
          %176 = sbr.rel (%p174) target = $region20
        $region19: #{tpu_custom_call.1} parent=11 // pred_region
          %s178 = ssub.s32 1024, 1024
          %179 = vsyncadd [#allocation5], %s178
          %s180 = smul.addr %s21, 64
          %s181 = scalar_lea.hbm %s3, %s180
          %s182 = sshll.u32 [#allocation4], 4
          %s183 = int_to_ptr.vmem [resolvable:$true] %s182
          %188 = dma.hbm_to_vmem [thread:$0]  %s181, 1024, %s183, [#allocation5], 64, 64, 4
        $region20: #{tpu_custom_call.1} parent=11 // pred_fallthru
          _
      $region12: #{tpu_custom_call.1} parent=5 // pred_fallthru
        _
      %p189 = scmp.lt.s32.totalorder %s11, 2
      // Predicated region
      $region21: #{tpu_custom_call.1} parent=5 // pred_check
        %p190 = pneg %p189
      $region22: #{tpu_custom_call.1} parent=5 // pred_check_branch
        %192 = sbr.rel (%p190) target = $region24
      $region23: #{tpu_custom_call.1} parent=5 // pred_region
        // Predicated region
        $region25: #{tpu_custom_call.1} parent=23 // pred_check
          %p193 = pneg %p43
        $region26: #{tpu_custom_call.1} parent=23 // pred_check_branch
          %195 = sbr.rel (%p193) target = $region28
        $region27: #{tpu_custom_call.1} parent=23 // pred_region
          %p196 = scmp.lt.s32.totalorder %s18, 1
          %s197 = scalar_select %p196, %s18, 1
          %s198 = smul.addr %s197, 8
          %s199 = scalar_lea.vmem %s0, %s198
        $region28: #{tpu_custom_call.1} parent=23 // pred_fallthru
          _
        // Predicated region
        $region29: #{tpu_custom_call.1} parent=23 // pred_check
          %p200 = pneg %p95
        $region30: #{tpu_custom_call.1} parent=23 // pred_check_branch
          %202 = sbr.rel (%p200) target = $region32
        $region31: #{tpu_custom_call.1} parent=23 // pred_region
          %p203 = scmp.lt.s32.totalorder %s18, 1
          %s204 = scalar_select %p203, %s18, 1
          %s205 = smul.addr %s204, 4
          %s206 = scalar_lea.vmem %s2, %s205
        $region32: #{tpu_custom_call.1} parent=23 // pred_fallthru
          _
      $region24: #{tpu_custom_call.1} parent=5 // pred_fallthru
        _
      %p207 = scmp.le.s32.totalorder 1, %s11
      %p208 = scmp.lt.s32.totalorder %s11, 3
      %p209 = pnand %p207, %p208
      %p210 = pneg %p209
      // Predicated region
      $region33: #{tpu_custom_call.1} parent=5 // pred_check
        _
      $region34: #{tpu_custom_call.1} parent=5 // pred_check_branch
        %212 = sbr.rel (%p209) target = $region36
      $region35: #{tpu_custom_call.1} parent=5 // pred_region
        %s213 = ssub.s32 %s11, 1
        // Predicated region
        $region37: #{tpu_custom_call.1} parent=35 // pred_check
          %p214 = pneg %p127
        $region38: #{tpu_custom_call.1} parent=35 // pred_check_branch
          %216 = sbr.rel (%p214) target = $region40
        $region39: #{tpu_custom_call.1} parent=35 // pred_region
          %217 = dma.done [#allocation5], 1024
        $region40: #{tpu_custom_call.1} parent=35 // pred_fallthru
          _
        %p218 = scmp.lt.s32.totalorder %s20, 1
        %s219 = scalar_select %p218, %s20, 1
        %s220 = smul.addr %s219, 8
        %s221 = scalar_lea.vmem %s0, %s220
        %p222 = pneg %p49
        %p223 = pneg %p46
        %p224 = scmp.lt.s32.totalorder %s21, 0
        %s225 = scalar_select %p224, %s21, 0
        %s226 = scalar_lea.vmem %s1, %s225
        %p227 = pneg %p75
        %p228 = pneg %p72
        %p229 = scmp.lt.s32.totalorder %s20, 1
        %s230 = scalar_select %p229, %s20, 1
        %s231 = smul.addr %s230, 4
        %s232 = scalar_lea.vmem %s2, %s231
        %p233 = pneg %p101
        %p234 = pneg %p98
        %p235 = pneg %p127
        %p236 = pneg %p124
        %p237 = pneg %p153
        %p238 = pneg %p150
        %p239 = scmp.lt.s32.totalorder %s20, 1
        %s240 = scalar_select %p239, %s20, 1
        %s241 = smul.addr %s240, 8
        %s242 = scalar_lea.vmem %s4, %s241
        %p243 = scmp.lt.s32.totalorder %s20, 1
        %s244 = scalar_select %p243, %s20, 1
        %s245 = smul.addr %s244, 8
        %s246 = scalar_lea.vmem %s0, %s245
        %p247 = scmp.lt.s32.totalorder %s21, 0
        %s248 = scalar_select %p247, %s21, 0
        %s249 = scalar_lea.vmem %s1, %s248
        %p250 = scmp.lt.s32.totalorder %s20, 1
        %s251 = scalar_select %p250, %s20, 1
        %s252 = smul.addr %s251, 4
        %s253 = scalar_lea.vmem %s2, %s252
        %p254 = scmp.lt.s32.totalorder %s20, 1
        %s255 = scalar_select %p254, %s20, 1
        %s256 = smul.addr %s255, 8
        %s257 = scalar_lea.vmem %s4, %s256
        %p259 = scmp.eq.s32.totalorder %s21, 0
        // Predicated region
        $region41: #{tpu_custom_call.1} parent=35 // pred_check
          %p260 = pneg %p259
        $region42: #{tpu_custom_call.1} parent=35 // pred_check_branch
          %262 = sbr.rel (%p260) target = $region44
        $region43: #{tpu_custom_call.1} parent=35 // pred_region
          %263 = vst [vmem:[#allocation2] sm:$0xff] 0.0
          %264 = vst [vmem:[#allocation3] sm:$0xff] 0.0
        $region44: #{tpu_custom_call.1} parent=35 // pred_fallthru
          _
        %v265 = vld [vmem:[%s253] sm:$0xf]
        %v266 = vld [vmem:[#allocation4] sm:$0xf]
        %v267 = vld [vmem:[#allocation4 + $0x4] sm:$0xf]
        %v268 = vld [vmem:[#allocation4 + $0x8] sm:$0xf]
        %v269 = vld [vmem:[#allocation4 + $0xc] sm:$0xf]
        %v270 = vld [vmem:[#allocation4 + $0x10] sm:$0xf]
        %v271 = vld [vmem:[#allocation4 + $0x14] sm:$0xf]
        %v272 = vld [vmem:[#allocation4 + $0x18] sm:$0xf]
        %v273 = vld [vmem:[#allocation4 + $0x1c] sm:$0xf]
        %v274 = vld [vmem:[#allocation4 + $0x20] sm:$0xf]
        %v275 = vld [vmem:[#allocation4 + $0x24] sm:$0xf]
        %v276 = vld [vmem:[#allocation4 + $0x28] sm:$0xf]
        %v277 = vld [vmem:[#allocation4 + $0x2c] sm:$0xf]
        %v278 = vld [vmem:[#allocation4 + $0x30] sm:$0xf]
        %v279 = vld [vmem:[#allocation4 + $0x34] sm:$0xf]
        %v280 = vld [vmem:[#allocation4 + $0x38] sm:$0xf]
        %v281 = vld [vmem:[#allocation4 + $0x3c] sm:$0xf]
        %v298 = vunpack.c.l.b16 %v266
        %v299 = vunpack.c.l.b16 %v267
        %v300 = vunpack.c.l.b16 %v268
        %v301 = vunpack.c.l.b16 %v269
        %v302 = vunpack.c.l.b16 %v270
        %v303 = vunpack.c.l.b16 %v271
        %v304 = vunpack.c.l.b16 %v272
        %v305 = vunpack.c.l.b16 %v273
        %v306 = vunpack.c.l.b16 %v274
        %v307 = vunpack.c.l.b16 %v275
        %v308 = vunpack.c.l.b16 %v276
        %v309 = vunpack.c.l.b16 %v277
        %v310 = vunpack.c.l.b16 %v278
        %v311 = vunpack.c.l.b16 %v279
        %v312 = vunpack.c.l.b16 %v280
        %v313 = vunpack.c.l.b16 %v281
        %v314 = vpack.c.b16 %v299, %v298
        %v315 = vpack.c.b16 %v301, %v300
        %v316 = vpack.c.b16 %v303, %v302
        %v317 = vpack.c.b16 %v305, %v304
        %v318 = vpack.c.b16 %v307, %v306
        %v319 = vpack.c.b16 %v309, %v308
        %v320 = vpack.c.b16 %v311, %v310
        %v321 = vpack.c.b16 %v313, %v312
        %330 = vmatprep.subr.bf16.mxu0 0
        %331 = vmatpush1.bf16.msra.mxu0 %v314
        %332 = vmatprep.subr.bf16.mxu0 0
        %333 = vmatpush1.bf16.msra.mxu0 %v315
        %334 = vmatprep.subr.bf16.mxu0 0
        %335 = vmatpush1.bf16.msra.mxu0 %v316
        %336 = vmatprep.subr.bf16.mxu0 0
        %337 = vmatpush1.bf16.msra.mxu0 %v317
        %338 = vmatprep.subr.bf16.mxu0 0
        %339 = vmatpush1.bf16.msra.mxu0 %v318
        %340 = vmatprep.subr.bf16.mxu0 0
        %341 = vmatpush1.bf16.msra.mxu0 %v319
        %342 = vmatprep.subr.bf16.mxu0 0
        %343 = vmatpush1.bf16.msra.mxu0 %v320
        %344 = vmatprep.subr.bf16.mxu0 0
        %345 = vmatpush1.bf16.msra.mxu0 %v321
        %346 = vmatprep.subr.bf16.mxu0 0
        %347 = vmatpush1.bf16.msra.mxu0 0
        %348 = vmatprep.subr.bf16.mxu0 0
        %349 = vmatpush1.bf16.msra.mxu0 0
        %350 = vmatprep.subr.bf16.mxu0 0
        %351 = vmatpush1.bf16.msra.mxu0 0
        %352 = vmatprep.subr.bf16.mxu0 0
        %353 = vmatpush1.bf16.msra.mxu0 0
        %354 = vmatprep.subr.bf16.mxu0 0
        %355 = vmatpush1.bf16.msra.mxu0 0
        %356 = vmatprep.subr.bf16.mxu0 0
        %357 = vmatpush1.bf16.msra.mxu0 0
        %358 = vmatprep.subr.bf16.mxu0 0
        %359 = vmatpush1.bf16.msra.mxu0 0
        %360 = vmatprep.subr.bf16.mxu0 0
        %361 = vmatpush1.bf16.msra.mxu0 0
        %362 = vmatprep.mubr.bf16.mxu0 0
        %363 = vmatmul.mubr.bf16.gmra.mrb[0].mxu0 %v265
        %v364 = vpop.f32.mrb[0].mxu0
        %v365 = vadd.f32 0.0, %v364
        %v366 = vpop.f32.mrb[0].mxu0
        %v367 = vpop.f32.mrb[0].mxu0
        %v368 = vpop.f32.mrb[0].mxu0
        %369 = vdwg.mxu0
        %v370 = vmul.f32 %v365, 1.442695
        %v371 = vpow.pop %v370
        %v372 = vld [vmem:[%s246] sm:$0xff]
        %v373 = vld [vmem:[%s249] sm:$0x1]
        %s374 = smul.u32 %s20, 8
        %s375 = smul.u32 %s21, 128
        %s376 = sadd.s32 %s375, 128
        %p377 = scmp.lt.s32.totalorder %s374, %s376
        %s378 = sadd.s32 %s374, 8
        %p379 = scmp.lt.s32.totalorder %s375, %s378
        %p380 = pnand %p377, %p379
        %p381 = pneg %p380
        // Predicated region
        $region45: #{tpu_custom_call.1} parent=35 // pred_check
          _
        $region46: #{tpu_custom_call.1} parent=35 // pred_check_branch
          %383 = sbr.rel (%p380) target = $region48
        $region47: #{tpu_custom_call.1} parent=35 // pred_region
          %v384 = vlaneseq
          %v385 = vshrl.u32 %v384, 7
          %v386 = vstv %s374
          %v387 = vadd.s32 %v385, %v386
          %v388 = vlaneseq
          %v389 = vand.u32 %v388, 127
          %v390 = vstv %s375
          %v391 = vadd.s32 %v389, %v390
          %vm392 = vcmp.eq.s32.totalorder %v387, %v391
          %v393 = vsel %vm392, 0.0, %v371
          %394 = vset.pattern.permute.xlu0 0
          %395 = vperm.xlu0 %394, %v372
          %v396 = vpop.permute.xlu0 %395
          %v397 = vlaneseq
          %v398 = vshrl.u32 %v397, 7
          %v399 = vsub.s32 0, %v398
          %v400 = vrot.slane %v373, %v399
          %vm401 = vcmp.eq.s32.totalorder %v396, %v400
          %v402 = vsel %vm401, %v393, 0.0
          %v403 = vld [vmem:[#allocation2] sm:$0xff]
          %v404 = vadd.f32 %v403, %v402
          %405 = vst [vmem:[#allocation2] sm:$0xff] %v404
          %v406 = vld [vmem:[#allocation3] sm:$0xff]
          %v407 = vadd.f32 %v406, %v393
          %408 = vst [vmem:[#allocation3] sm:$0xff] %v407
        $region48: #{tpu_custom_call.1} parent=35 // pred_fallthru
          _
        %p409 = pneg %p381
        // Predicated region
        $region49: #{tpu_custom_call.1} parent=35 // pred_check
          _
        $region50: #{tpu_custom_call.1} parent=35 // pred_check_branch
          %411 = sbr.rel (%p381) target = $region52
        $region51: #{tpu_custom_call.1} parent=35 // pred_region
          %412 = vset.pattern.permute.xlu0 0
          %413 = vperm.xlu0 %412, %v372
          %v414 = vpop.permute.xlu0 %413
          %v415 = vlaneseq
          %v416 = vshrl.u32 %v415, 7
          %v417 = vsub.s32 0, %v416
          %v418 = vrot.slane %v373, %v417
          %vm419 = vcmp.eq.s32.totalorder %v414, %v418
          %v420 = vsel %vm419, %v371, 0.0
          %v421 = vld [vmem:[#allocation2] sm:$0xff]
          %v422 = vadd.f32 %v421, %v420
          %423 = vst [vmem:[#allocation2] sm:$0xff] %v422
          %v424 = vld [vmem:[#allocation3] sm:$0xff]
          %v425 = vadd.f32 %v424, %v371
          %426 = vst [vmem:[#allocation3] sm:$0xff] %v425
        $region52: #{tpu_custom_call.1} parent=35 // pred_fallthru
          _
        // Predicated region
        $region53: #{tpu_custom_call.1} parent=35 // pred_check
          %p427 = pneg %p259
        $region54: #{tpu_custom_call.1} parent=35 // pred_check_branch
          %429 = sbr.rel (%p427) target = $region56
        $region55: #{tpu_custom_call.1} parent=35 // pred_region
          %v430 = vld [vmem:[#allocation3] sm:$0xff]
          %431 = vadd.xlane.f32.xlu0 %v430
          %v432 = vpop.xlane.xlu0 %431
          %v433 = vsub.f32 %v432, 112.0
          %v434 = vld [vmem:[#allocation2] sm:$0xff]
          %435 = vadd.xlane.f32.xlu0 %v434
          %v436 = vpop.xlane.xlu0 %435
          %v437 = vmul.f32 %v433, 1e-07
          %v438 = vadd.f32 %v436, %v437
          %v439 = vlog2.pop %v438
          %v440 = vmul.f32 %v439, 0.6931472
          %v441 = vlog2.pop %v433
          %v442 = vmul.f32 %v441, 0.6931472
          %v443 = vsub.f32 %v440, %v442
          %vm444 = vcmask 7168
          %445 = vst.msk [vmem:[%s257] sm:$0xff] %vm444, %v443
        $region56: #{tpu_custom_call.1} parent=35 // pred_fallthru
          _
        %p446 = scmp.lt.s32.totalorder %s20, 1
        %s447 = scalar_select %p446, %s20, 1
        %s448 = smul.addr %s447, 8
        %s449 = scalar_lea.vmem %s4, %s448
        // Predicated region
        $region57: #{tpu_custom_call.1} parent=35 // pred_check
          %p450 = pneg %p150
        $region58: #{tpu_custom_call.1} parent=35 // pred_check_branch
          %452 = sbr.rel (%p450) target = $region60
        $region59: #{tpu_custom_call.1} parent=35 // pred_region
          _
        $region60: #{tpu_custom_call.1} parent=35 // pred_fallthru
          _
      $region36: #{tpu_custom_call.1} parent=5 // pred_fallthru
        _
      %p453 = scmp.le.s32.totalorder 2, %s11
      // Predicated region
      $region61: #{tpu_custom_call.1} parent=5 // pred_check
        %p454 = pneg %p453
      $region62: #{tpu_custom_call.1} parent=5 // pred_check_branch
        %456 = sbr.rel (%p454) target = $region64
      $region63: #{tpu_custom_call.1} parent=5 // pred_region
        %s457 = ssub.s32 %s11, 2
        // Predicated region
        $region65: #{tpu_custom_call.1} parent=63 // pred_check
          %p458 = pneg %p156
        $region66: #{tpu_custom_call.1} parent=63 // pred_check_branch
          %460 = sbr.rel (%p458) target = $region68
        $region67: #{tpu_custom_call.1} parent=63 // pred_region
          %p461 = scmp.lt.s32.totalorder %s22, 1
          %s462 = scalar_select %p461, %s22, 1
          %s463 = smul.addr %s462, 8
          %s464 = scalar_lea.vmem %s4, %s463
        $region68: #{tpu_custom_call.1} parent=63 // pred_fallthru
          _
      $region64: #{tpu_custom_call.1} parent=5 // pred_fallthru
        _
    $region6: #{tpu_custom_call.1} parent=1 // loop_footer
      %s15 = sadd.s32 1, %s11
    $region7: #{tpu_custom_call.1} parent=1 // loop_footer_branch
      %10 = sbr.rel target = $region3
    $region8: #{tpu_custom_call.1} parent=1 // loop_exit
      _
    %465 = vsyncpa [#allocation5], 1
    %s466 = scalar_lea.sflag [#allocation5], 1
    %467 = vsyncpa %s466, 1

</llo_original>
